<compile_context>
chip_gen: v5e
topology: v5e:2x2
jax: 0.10.0
libtpu: 0.0.40
codegen_flags: <defaults>
</compile_context>

<pallas_src>
import jax
import jax.numpy as jnp
from jax import lax
from jax.experimental import pallas as pl
from jax.experimental.pallas import tpu as pltpu


def ff_layer_kernel(x_ref, w_ref, b_ref, o_ref):
    # x_ref: (TB, Din)   w_ref: (Dout, Din) [torch layout]   b_ref: (1, Dout)
    # o_ref: (TB, Dout)
    x = x_ref[...]

    # L2 normalize each row (torch: x / (x.norm(p=2, dim=1, keepdim=True) + 1e-7)).
    # Reduction math in f32 regardless of input dtype; per-row reciprocal then
    # multiply (cheaper than a (TB, Din) broadcast divide).
    x_f32 = x.astype(jnp.float32)
    norm = jnp.sqrt(jnp.sum(x_f32 * x_f32, axis=1, keepdims=True))
    inv = pl.reciprocal(norm + 1e-7, approx=False)
    xn = (x_f32 * inv).astype(x.dtype)  # back to native dtype for the MXU

    # Linear: contract on the weight's last (Din) dim — no wrapper transpose.
    # Output (TB, Dout) is lane-dense in Dout; f32 MXU accumulation.
    y = lax.dot_general(
        xn, w_ref[...],
        dimension_numbers=(((1,), (1,)), ((), ())),
        preferred_element_type=jnp.float32)
    y = y + b_ref[...].astype(jnp.float32)

    # Dropout (eval mode -> identity) then ReLU.
    o_ref[...] = jnp.maximum(y, 0.0).astype(o_ref.dtype)


def ff_layer_forward(x, weight, bias, *, block_b=None):
    """x: (B, Din), weight: (Dout, Din) [torch layout], bias: (Dout,) -> (B, Dout)."""
    B, Din = x.shape
    Dout, Din2 = weight.shape
    assert Din == Din2, (Din, Din2)

    b2d = bias.reshape(1, Dout)  # cheap metadata reshape, no transpose

    if block_b is None:
        if B <= 1024:
            block_b = B            # whole batch resident while small
        else:
            # ~512-row tiles are the measured mem-bound sweet spot; 512 is a
            # multiple of both 8 (f32) and 16 (bf16) sublane packing, and gives
            # an even-ish grid for v7x's two TensorCores to split.
            block_b = 512
    nb = pl.cdiv(B, block_b)

    # Resident-VMEM estimate: W + bias single-buffered, x / out tiles
    # double-buffered by the pipeline.  Only raise the scoped limit if needed.
    est = (Dout * Din * weight.dtype.itemsize
           + Dout * bias.dtype.itemsize
           + 2 * block_b * Din * x.dtype.itemsize
           + 2 * block_b * Dout * x.dtype.itemsize)
    vmem_limit = None
    if est > 12 * 1024 * 1024:
        vmem_limit = min(int(est * 1.5), 128 * 1024 * 1024)

    return pl.pallas_call(
        ff_layer_kernel,
        out_shape=jax.ShapeDtypeStruct((B, Dout), x.dtype),
        grid=(nb,),
        in_specs=[
            # x batch tile (double-buffered across the batch grid).
            pl.BlockSpec((block_b, Din), lambda i: (i, 0)),
            # Full weight, grid-invariant -> single-buffered to halve its VMEM.
            pl.BlockSpec((Dout, Din), lambda i: (0, 0),
                         pipeline_mode=pl.Buffered(1)),
            # Bias row, grid-invariant -> single-buffered.
            pl.BlockSpec((1, Dout), lambda i: (0, 0),
                         pipeline_mode=pl.Buffered(1)),
        ],
        out_specs=pl.BlockSpec((block_b, Dout), lambda i: (i, 0)),
        compiler_params=pltpu.CompilerParams(
            # Batch tiles are independent -> shard across TCs on v7x.
            dimension_semantics=("parallel",),
            vmem_limit_bytes=vmem_limit,
        ),
    )(x, weight, b2d)


if __name__ == "__main__":
    # Small shapes consistent with the module's forward:
    # batch=16 rows, in_dims=32, out_dims=128 (lane-dense output).
    B, in_dims, out_dims = 16, 32, 128

    key = jax.random.PRNGKey(0)
    kx, kw, kb = jax.random.split(key, 3)
    x = jax.random.normal(kx, (B, in_dims), dtype=jnp.float32)
    weight = 0.1 * jax.random.normal(kw, (out_dims, in_dims), dtype=jnp.float32)
    bias = 0.1 * jax.random.normal(kb, (out_dims,), dtype=jnp.float32)

    # Pure-JAX reference (matches the torch forward in eval mode).
    norm = jnp.sqrt(jnp.sum(x * x, axis=1, keepdims=True))
    ref = jnp.maximum((x / (norm + 1e-7)) @ weight.T + bias[None, :], 0.0)

    # Single-tile call (whole batch resident, grid=(1,)).
    y = jax.block_until_ready(ff_layer_forward(x, weight, bias))
    assert y.shape == (B, out_dims), y.shape
    assert jnp.allclose(y, ref, atol=1e-5, rtol=1e-5), float(jnp.max(jnp.abs(y - ref)))

    # Multi-tile call (grid=(2,)): exercises the batch-tiled, single-buffered
    # resident-weight path that large B / v7x would use.
    y2 = jax.block_until_ready(ff_layer_forward(x, weight, bias, block_b=8))
    assert jnp.allclose(y2, ref, atol=1e-5, rtol=1e-5), float(jnp.max(jnp.abs(y2 - ref)))

    print("KERNEL_OK")
</pallas_src>

<mosaic_0001>
module attributes {stable_mosaic.version = 11 : i64} {
  func.func @ff_layer_kernel(%arg0: i32, %arg1: memref<16x32xf32, #tpu.memory_space<vmem>>, %arg2: memref<128x32xf32, #tpu.memory_space<vmem>>, %arg3: memref<1x128xf32, #tpu.memory_space<vmem>>, %arg4: memref<16x128xf32, #tpu.memory_space<vmem>>) attributes {dimension_semantics = [#tpu.dimension_semantics<parallel>], iteration_bounds = array<i64: 1>, scalar_prefetch = 0 : i64, scratch_operands = 0 : i64, tpu.core_type = #tpu.core_type<tc>, window_params = [{transform_indices = @transform_0, window_bounds = array<i64: 16, 32>}, {pipeline_mode = #tpu.pipeline_mode<synchronous>, transform_indices = @transform_1, window_bounds = array<i64: 128, 32>}, {pipeline_mode = #tpu.pipeline_mode<synchronous>, transform_indices = @transform_2, window_bounds = array<i64: 1, 128>}, {transform_indices = @transform_3, window_bounds = array<i64: 16, 128>}]} {
    %c0 = arith.constant 0 : index
    %c0_0 = arith.constant 0 : index
    %0 = vector.load %arg1[%c0, %c0_0] : memref<16x32xf32, #tpu.memory_space<vmem>>, vector<16x32xf32>
    %1 = arith.mulf %0, %0 : vector<16x32xf32>
    %cst = arith.constant dense<0.000000e+00> : vector<16xf32>
    %2 = vector.multi_reduction <add>, %1, %cst [1] : vector<16x32xf32> to vector<16xf32>
    %3 = vector.shape_cast %2 : vector<16xf32> to vector<16x1xf32>
    %4 = math.sqrt %3 : vector<16x1xf32>
    %cst_1 = arith.constant 1.000000e-07 : f32
    %5 = vector.broadcast %cst_1 : f32 to vector<16x1xf32>
    %6 = arith.addf %4, %5 : vector<16x1xf32>
    %7 = tpu.reciprocal %6 : vector<16x1xf32> -> vector<16x1xf32>
    %8 = vector.broadcast %7 : vector<16x1xf32> to vector<16x32xf32>
    %9 = arith.mulf %0, %8 : vector<16x32xf32>
    %c0_2 = arith.constant 0 : index
    %c0_3 = arith.constant 0 : index
    %10 = vector.load %arg2[%c0_2, %c0_3] : memref<128x32xf32, #tpu.memory_space<vmem>>, vector<128x32xf32>
    %cst_4 = arith.constant dense<0.000000e+00> : vector<16x128xf32>
    %11 = tpu.matmul %9, %10, %cst_4 {dimension_numbers = #tpu.dot_dimension_numbers<[1], [1], [0], [0], [0, 0, 1, 0], [], []>} : vector<16x32xf32>, vector<128x32xf32>, vector<16x128xf32> -> vector<16x128xf32>
    %c0_5 = arith.constant 0 : index
    %c0_6 = arith.constant 0 : index
    %12 = vector.load %arg3[%c0_5, %c0_6] : memref<1x128xf32, #tpu.memory_space<vmem>>, vector<1x128xf32>
    %13 = vector.broadcast %12 : vector<1x128xf32> to vector<16x128xf32>
    %14 = arith.addf %11, %13 : vector<16x128xf32>
    %cst_7 = arith.constant 0.000000e+00 : f32
    %15 = vector.broadcast %cst_7 : f32 to vector<16x128xf32>
    %16 = arith.maximumf %14, %15 : vector<16x128xf32>
    %c0_8 = arith.constant 0 : index
    %c0_9 = arith.constant 0 : index
    %17 = vector.load %arg4[%c0_8, %c0_9] : memref<16x128xf32, #tpu.memory_space<vmem>>, vector<16x128xf32>
    tpu.vector_store %arg4[%c0_8, %c0_9], %16 {strides = array<i32>} : memref<16x128xf32, #tpu.memory_space<vmem>>, vector<16x128xf32>,
    return
  }
  func.func @transform_0(%arg0: i32) -> (i32, i32) {
    %c0_i32 = arith.constant 0 : i32
    %c0_i32_0 = arith.constant 0 : i32
    return %arg0, %c0_i32 : i32, i32
  }
  func.func @transform_1(%arg0: i32) -> (i32, i32) {
    %c0_i32 = arith.constant 0 : i32
    %c0_i32_0 = arith.constant 0 : i32
    %c0_i32_1 = arith.constant 0 : i32
    return %c0_i32, %c0_i32_0 : i32, i32
  }
  func.func @transform_2(%arg0: i32) -> (i32, i32) {
    %c0_i32 = arith.constant 0 : i32
    %c0_i32_0 = arith.constant 0 : i32
    %c0_i32_1 = arith.constant 0 : i32
    return %c0_i32, %c0_i32_0 : i32, i32
  }
  func.func @transform_3(%arg0: i32) -> (i32, i32) {
    %c0_i32 = arith.constant 0 : i32
    %c0_i32_0 = arith.constant 0 : i32
    return %arg0, %c0_i32 : i32, i32
  }
}

</mosaic_0001>

<llo_original>
// kernel: tpu_custom_call.1
$region0: #{tpu_custom_call.1}
  #allocation0 [shape = 'u32[]', space=smem, size = 0x4, offset = 0x4, fixed_abs, tag = 'smem constant byte address 0x4 - core index']
  #allocation1 [shape = 'u32[72,128]{1,0:T(1,128)}', space=vmem, size = 0x9000, scoped, tag = 'internal scratch']
  %s0 = inlined_call_operand.vmem [shape: f32[16,32], index: 0, kind: input, shape index: {}]
  %s1 = inlined_call_operand.vmem [shape: f32[128,32], index: 1, kind: input, shape index: {}]
  %s2 = inlined_call_operand.vmem [shape: f32[1,128], index: 2, kind: input, shape index: {}]
  %s3 = inlined_call_operand.hbm [shape: f32[16,128], index: 3, kind: output, shape index: {}]
  %s4 = sld [smem:[#allocation0]]
  $region22: #{tpu_custom_call.1} parent=0
    _
  %s6 = ssub.s32 1, %s4
  %s7 = scalar_select 0, %s6, %s4
  $region1: #{tpu_custom_call.1} parent=0
    #allocation2 [shape = 'u8[8192]{0}', space=vmem, size = 0x2000, scoped, tag = 'output window, operand 0, single buffered']
    #allocation3 [shape = 's32[1]{0}', space=sflag, size = 0x4, scoped, tag = 'scoped memory for tpu_custom_call.1']
    %8 = vsyncpa [#allocation3], 0
    // Predicated region
    $region2: #{tpu_custom_call.1} parent=1 // pred_check
      _
    $region3: #{tpu_custom_call.1} parent=1 // pred_check_branch
      %10 = sbr.rel (0) target = $region5
    $region4: #{tpu_custom_call.1} parent=1 // pred_region
      _
    $region5: #{tpu_custom_call.1} parent=1 // pred_fallthru
      _
    // Predicated region
    $region6: #{tpu_custom_call.1} parent=1 // pred_check
      _
    $region7: #{tpu_custom_call.1} parent=1 // pred_check_branch
      %12 = sbr.rel (0) target = $region9
    $region8: #{tpu_custom_call.1} parent=1 // pred_region
      _
    $region9: #{tpu_custom_call.1} parent=1 // pred_fallthru
      _
    // Predicated region
    $region10: #{tpu_custom_call.1} parent=1 // pred_check
      _
    $region11: #{tpu_custom_call.1} parent=1 // pred_check_branch
      %14 = sbr.rel (0) target = $region13
    $region12: #{tpu_custom_call.1} parent=1 // pred_region
      _
    $region13: #{tpu_custom_call.1} parent=1 // pred_fallthru
      _
    %v15 = vld [vmem:[%s0] sm:$0xff]
    %v16 = vld [vmem:[%s0 + $0x8] sm:$0xff]
    %v17 = vmul.f32 %v15, %v15
    %v18 = vmul.f32 %v16, %v16
    %vm19 = vcmask 261120
    %v20 = vsel %vm19, %v17, 0.0
    %21 = vadd.xlane.f32.xlu0 %v20
    %v22 = vpop.xlane.xlu0 %21
    %v23 = vsel %vm19, %v18, 0.0
    %24 = vadd.xlane.f32.xlu0 %v23
    %v25 = vpop.xlane.xlu0 %24
    %v26 = vrsqrt.pop %v22
    %v27 = vmul.f32 %v26, %v22
    %v28 = vmul.f32 %v27, %v26
    %v29 = vmul.f32 0.5, %v28
    %v30 = vsub.f32 1.5, %v29
    %v31 = vmul.f32 %v26, %v30
    %v32 = vmul.f32 %v22, %v31
    %vm33 = vcmp.eq.f32.partialorder %v22, inf
    %v34 = vsel %vm33, %v22, %v32
    %vm35 = vcmp.eq.f32.partialorder %v22, 0.0
    %v36 = vand.u32 %v22, 2147483648
    %v37 = vsel %vm35, %v36, %v34
    %v38 = vrsqrt.pop %v25
    %v39 = vmul.f32 %v38, %v25
    %v40 = vmul.f32 %v39, %v38
    %v41 = vmul.f32 0.5, %v40
    %v42 = vsub.f32 1.5, %v41
    %v43 = vmul.f32 %v38, %v42
    %v44 = vmul.f32 %v25, %v43
    %vm45 = vcmp.eq.f32.partialorder %v25, inf
    %v46 = vsel %vm45, %v25, %v44
    %vm47 = vcmp.eq.f32.partialorder %v25, 0.0
    %v48 = vand.u32 %v25, 2147483648
    %v49 = vsel %vm47, %v48, %v46
    %v50 = vadd.f32 %v37, 1e-07
    %v51 = vadd.f32 %v49, 1e-07
    %v52 = vrcp.pop %v50
    %v53 = vmul.f32 %v50, %v52
    %v54 = vsub.f32 1.0, %v53
    %v55 = vmul.f32 %v52, %v54
    %v56 = vadd.f32 %v52, %v55
    %vm57 = vweird.f32 %v50
    %vm58 = vweird.f32 %v52
    %vm59 = vmor %vm57, %vm58
    %v60 = vsel %vm59, %v52, %v56
    %v61 = vand.u32 2147483647, %v50
    %vm62 = vcmp.eq.f32.partialorder %v61, 8.507059e+37
    %v63 = vand.u32 %v50, 2147483648
    %v64 = vor.u32 1.1754944e-38, %v63
    %v65 = vsel %vm62, %v64, %v60
    %v66 = vrcp.pop %v51
    %v67 = vmul.f32 %v51, %v66
    %v68 = vsub.f32 1.0, %v67
    %v69 = vmul.f32 %v66, %v68
    %v70 = vadd.f32 %v66, %v69
    %vm71 = vweird.f32 %v51
    %vm72 = vweird.f32 %v66
    %vm73 = vmor %vm71, %vm72
    %v74 = vsel %vm73, %v66, %v70
    %v75 = vand.u32 2147483647, %v51
    %vm76 = vcmp.eq.f32.partialorder %v75, 8.507059e+37
    %v77 = vand.u32 %v51, 2147483648
    %v78 = vor.u32 1.1754944e-38, %v77
    %v79 = vsel %vm76, %v78, %v74
    %v80 = vmul.f32 %v15, %v65
    %v81 = vmul.f32 %v16, %v79
    %v82 = vld [vmem:[%s1] sm:$0xff]
    %v83 = vld [vmem:[%s1 + $0x8] sm:$0xff]
    %v84 = vld [vmem:[%s1 + $0x10] sm:$0xff]
    %v85 = vld [vmem:[%s1 + $0x18] sm:$0xff]
    %v86 = vld [vmem:[%s1 + $0x20] sm:$0xff]
    %v87 = vld [vmem:[%s1 + $0x28] sm:$0xff]
    %v88 = vld [vmem:[%s1 + $0x30] sm:$0xff]
    %v89 = vld [vmem:[%s1 + $0x38] sm:$0xff]
    %v90 = vld [vmem:[%s1 + $0x40] sm:$0xff]
    %v91 = vld [vmem:[%s1 + $0x48] sm:$0xff]
    %v92 = vld [vmem:[%s1 + $0x50] sm:$0xff]
    %v93 = vld [vmem:[%s1 + $0x58] sm:$0xff]
    %v94 = vld [vmem:[%s1 + $0x60] sm:$0xff]
    %v95 = vld [vmem:[%s1 + $0x68] sm:$0xff]
    %v96 = vld [vmem:[%s1 + $0x70] sm:$0xff]
    %v97 = vld [vmem:[%s1 + $0x78] sm:$0xff]
    %v98 = vld [vmem:[%s2] sm:$0x1]
    %v100 = vperm.slane %v98, 0
    %v103 = vsel %vm19, %v80, 0
    %v106 = vsel %vm19, %v81, 0
    %v109 = vsel %vm19, %v82, 0
    %v112 = vsel %vm19, %v83, 0
    %v115 = vsel %vm19, %v84, 0
    %v118 = vsel %vm19, %v85, 0
    %v121 = vsel %vm19, %v86, 0
    %v124 = vsel %vm19, %v87, 0
    %v127 = vsel %vm19, %v88, 0
    %v130 = vsel %vm19, %v89, 0
    %v133 = vsel %vm19, %v90, 0
    %v136 = vsel %vm19, %v91, 0
    %v139 = vsel %vm19, %v92, 0
    %v142 = vsel %vm19, %v93, 0
    %v145 = vsel %vm19, %v94, 0
    %v148 = vsel %vm19, %v95, 0
    %v151 = vsel %vm19, %v96, 0
    %v154 = vsel %vm19, %v97, 0
    %156 = vmatpush.xpose.msra.mxu0 %v154
    %157 = vmatpush.xpose.msra.mxu0 %v151
    %158 = vmatpush.xpose.msra.mxu0 %v148
    %159 = vmatpush.xpose.msra.mxu0 %v145
    %160 = vmatpush.xpose.msra.mxu0 %v142
    %161 = vmatpush.xpose.msra.mxu0 %v139
    %162 = vmatpush.xpose.msra.mxu0 %v136
    %163 = vmatpush.xpose.msra.mxu0 %v133
    %164 = vmatpush.xpose.msra.mxu0 %v130
    %165 = vmatpush.xpose.msra.mxu0 %v127
    %166 = vmatpush.xpose.msra.mxu0 %v124
    %167 = vmatpush.xpose.msra.mxu0 %v121
    %168 = vmatpush.xpose.msra.mxu0 %v118
    %169 = vmatpush.xpose.msra.mxu0 %v115
    %170 = vmatpush.xpose.msra.mxu0 %v112
    %171 = vmatpush.xpose.msra.mxu0 %v109
    %172 = vmatmul.f32.gmra.mxu0 %v103
    %v173 = vpop.f32.mrf.mxu0
    %v174 = vadd.f32 %v100, %v173
    %175 = vmatmul.f32.gmra.mxu0 %v106
    %v176 = vpop.f32.mrf.mxu0
    %v177 = vadd.f32 %v100, %v176
    %178 = vdwg.mxu0
    %v179 = vmax.f32 %v174, 0.0
    %v180 = vmax.f32 %v177, 0.0
    %181 = vst [vmem:[#allocation2] sm:$0xff] %v179
    %182 = vst [vmem:[#allocation2 + $0x8] sm:$0xff] %v180
    // Predicated region
    $region14: #{tpu_custom_call.1} parent=1 // pred_check
      _
    $region15: #{tpu_custom_call.1} parent=1 // pred_check_branch
      %184 = sbr.rel (0) target = $region17
    $region16: #{tpu_custom_call.1} parent=1 // pred_region
      %186 = vsyncadd [#allocation3], 0
      %s187 = sshll.u32 [#allocation2], 4
      %s188 = int_to_ptr.vmem [resolvable:$true] %s187
      %s189 = sshll.u32 %s3, 4
      %s190 = int_to_ptr.hbm [resolvable:$true] %s189
      %195 = dma.vmem_to_hbm [thread:$0]  %s188, 256, %s190, [#allocation3], 128, 128, 8
    $region17: #{tpu_custom_call.1} parent=1 // pred_fallthru
      _
    // Predicated region
    $region18: #{tpu_custom_call.1} parent=1 // pred_check
      _
    $region19: #{tpu_custom_call.1} parent=1 // pred_check_branch
      %197 = sbr.rel (0) target = $region21
    $region20: #{tpu_custom_call.1} parent=1 // pred_region
      %199 = dma.done [#allocation3], 256
    $region21: #{tpu_custom_call.1} parent=1 // pred_fallthru
      _
    %200 = vsyncpa [#allocation3], 1

</llo_original>
